<compile_context>
chip_gen: v5e
topology: v5e:2x2
jax: 0.10.0
libtpu: 0.0.40
codegen_flags: <defaults>
</compile_context>

<pallas_src>
import jax
import jax.numpy as jnp
from jax import lax
from jax.experimental import pallas as pl
from jax.experimental.pallas import tpu as pltpu


# ----------------------------------------------------------------------------- kernels ---

def _qa_head_kernel(ctx_ref, w_ref, b_ref, start_ref, end_ref, aux_ref,
                    fused_scr, cols_scr):
    """QA head for a block of Bb batch rows.

    Fused weight columns (lane-padded to 128), biases in b_ref (8, 1):
      0: wb                      -> start logits
      1: we_w[H:2H] (+ we_b)     -> per-token part of the end logits
      2: we_w[0:H]  (no bias)    -> x @ w1, from which hidden_start . w1 is selected
      3: classifier[:, 0] (+b)   -> no-answer logit 0 (CLS token row)
      4: classifier[:, 1] (+b)   -> no-answer logit 1 (CLS token row)
    """
    Bb, T, H = ctx_ref.shape

    # One fused MXU call for every per-token projection of this batch block (bf16 operands,
    # f32 accumulation).
    x2 = ctx_ref[...].reshape(Bb * T, H)
    fused_scr[...] = jnp.dot(x2, w_ref[...], preferred_element_type=jnp.float32)

    # Single batched transpose of the 8 useful columns into a token-on-lane slab, plus the
    # (8, 1) bias broadcast (replaces the old full-slab bias add and 8 per-row transposes).
    cols_scr[...] = jnp.transpose(fused_scr[:, 0:8]) + b_ref[...]

    iota_t = lax.broadcasted_iota(jnp.int32, (1, T), 1)
    lane = lax.broadcasted_iota(jnp.int32, (1, aux_ref.shape[2]), 1)

    # Cheap per-row tail: each iteration only touches a static (8, T) lane slice of cols_scr,
    # so the per-row live set is a handful of (1, T) rows.
    for b in range(Bb):
        cols = cols_scr[:, b * T:(b + 1) * T]                     # (8, T) lane-dense rows
        sl = cols[0:1, :]                                         # start logits     (1, T)
        xw2b = cols[1:2, :]                                       # x @ w2 + we_b    (1, T)
        xw1 = cols[2:3, :]                                        # x @ w1           (1, T)

        # answer_start_index = first-max argmax of the start logits
        smax = jnp.max(sl, axis=1, keepdims=True)
        sidx = jnp.min(jnp.where(sl == smax, iota_t, T), axis=1, keepdims=True)   # (1,1) i32

        # hidden_start @ w1 == (x @ w1)[start_idx]: lane select + reduce, no gather needed
        hs_w1 = jnp.sum(jnp.where(iota_t == sidx, xw1, 0.0), axis=1, keepdims=True)

        el = xw2b + hs_w1                                         # end logits       (1, T)

        # answer_end_index = argmax of end logits over tokens >= start index (the reference's
        # token_size - mask.sum() + argmax(masked_select(...)) reduces to this because the
        # mask is a contiguous tail).
        masked = jnp.where(iota_t >= sidx, el, -1e30)
        emax = jnp.max(masked, axis=1, keepdims=True)
        eidx = jnp.min(jnp.where(masked == emax, iota_t, T), axis=1, keepdims=True)

        # no_answer = classifier(contextual[:, 0, :]) -> CLS-token (t == 0) entries of the
        # fused classifier columns; pred_label = first-max argmax over the 2 classes.
        na0 = cols[3:4, 0:1]                                      # (1, 1)
        na1 = cols[4:5, 0:1]                                      # (1, 1)
        plabel = (na1 > na0).astype(jnp.float32)

        start_ref[b] = sl
        end_ref[b] = el
        aux_ref[b] = jnp.where(lane == 0, sidx.astype(jnp.float32),
                     jnp.where(lane == 1, eidx.astype(jnp.float32),
                     jnp.where(lane == 2, plabel,
                     jnp.where(lane == 3, na0,
                     jnp.where(lane == 4, na1, 0.0)))))


def _proj_softmax_kernel(x_ref, w_ref, b_ref, o_ref):
    """softmax(x @ W + b, axis=1) with the vocab streamed in tv-wide tiles (grid axis 1).

    x/W are bf16 (f32 accumulation); bias, logits and softmax math stay f32 so the -1e30
    padded-vocab bias and the max-subtraction behave exactly like the f32 reference.
    """
    j = pl.program_id(1)
    tv = w_ref.shape[1]

    logits = (jnp.dot(x_ref[...], w_ref[...], preferred_element_type=jnp.float32)
              + b_ref[...])
    col0 = pl.multiple_of(j * tv, 128)
    o_ref[:, pl.ds(col0, tv)] = logits

    # After the last vocab tile the whole logit row is resident -> normalize across all tiles.
    @pl.when(j == pl.num_programs(1) - 1)
    def _():
        full = o_ref[...]
        m = jnp.max(full, axis=1, keepdims=True)
        e = jnp.exp(full - m)
        o_ref[...] = e / jnp.sum(e, axis=1, keepdims=True)


# ---------------------------------------------------------------------------- wrappers ---

def qa_head(contextual, wb_w, wb_b, we_w, we_b, cls_w, cls_b, *, block_b=8):
    """Returns (start_logits (B,T), end_logits (B,T), no_answer (B,2),
    answer_start_index (B,) i32, answer_end_index (B,) f32, pred_label (B,) i32)."""
    B, T, H = contextual.shape
    assert T % 8 == 0, "sequence length must be a multiple of 8 (sublane tile)"
    NPAD = 128            # fused-projection lane width (full lane tile)
    AUXW = 128            # lane-dense packed-scalars slab width

    # Keep >= 2 grid steps whenever B >= 2 so the "parallel" batch axis can use both v7x
    # TensorCores; cap at block_b (bf16 ctx: Bb=8 -> ~15 MiB VMEM incl. double buffers at
    # real BERT sizes T=512, H=768, safely inside the 32 MiB scoped limit on all gens).
    Bb = min(block_b, max(1, B // 2)) if B >= 2 else 1
    nb = -(-B // Bb)
    B_pad = nb * Bb
    if B_pad != B:
        contextual = jnp.pad(contextual, ((0, B_pad - B), (0, 0), (0, 0)))

    # bf16 operand streaming (f32 accumulation in-kernel) halves HBM traffic on the
    # bandwidth-bound activation stream.
    ctx_bf16 = contextual.astype(jnp.bfloat16)

    w1 = we_w[0:H, :]          # multiplies hidden_start
    w2 = we_w[H:2 * H, :]      # multiplies the contextual tokens
    wfused = jnp.concatenate([wb_w, w2, w1, cls_w], axis=1)                # (H, 5)
    wfused = jnp.pad(wfused, ((0, 0), (0, NPAD - wfused.shape[1])))
    wfused = wfused.astype(jnp.bfloat16)
    bfused = jnp.concatenate([wb_b.reshape(1, 1), we_b.reshape(1, 1),
                              jnp.zeros((1, 1), jnp.float32),
                              cls_b.reshape(1, 2)], axis=1)                # (1, 5)
    bfused = jnp.pad(bfused, ((0, 0), (0, 8 - bfused.shape[1])))           # (1, 8)
    bfused = jnp.transpose(bfused)                                         # (8, 1) f32

    start3, end3, aux = pl.pallas_call(
        _qa_head_kernel,
        out_shape=(
            jax.ShapeDtypeStruct((B_pad, 1, T), jnp.float32),     # start logits (lane-dense)
            jax.ShapeDtypeStruct((B_pad, 1, T), jnp.float32),     # end logits   (lane-dense)
            jax.ShapeDtypeStruct((B_pad, 1, AUXW), jnp.float32),  # packed per-row scalars
        ),
        grid_spec=pltpu.PrefetchScalarGridSpec(
            num_scalar_prefetch=0,
            grid=(nb,),
            in_specs=[
                pl.BlockSpec((Bb, T, H), lambda i: (i, 0, 0)),
                pl.BlockSpec((H, NPAD), lambda i: (0, 0)),
                pl.BlockSpec((8, 1), lambda i: (0, 0)),
            ],
            out_specs=(
                pl.BlockSpec((Bb, 1, T), lambda i: (i, 0, 0)),
                pl.BlockSpec((Bb, 1, T), lambda i: (i, 0, 0)),
                pl.BlockSpec((Bb, 1, AUXW), lambda i: (i, 0, 0)),
            ),
            scratch_shapes=[
                pltpu.VMEM((Bb * T, NPAD), jnp.float32),   # fused matmul result
                pltpu.VMEM((8, Bb * T), jnp.float32),      # token-on-lane useful columns
            ],
        ),
        compiler_params=pltpu.CompilerParams(
            dimension_semantics=("parallel",),      # batch blocks are independent (2x on v7x)
            vmem_limit_bytes=32 * 1024 * 1024,
        ),
        cost_estimate=pl.CostEstimate(
            flops=2 * B_pad * T * H * NPAD,
            transcendentals=0,
            bytes_accessed=(2 * B_pad * T * H + 2 * H * NPAD + 4 * 8
                            + 4 * (2 * B_pad * T + B_pad * AUXW)),
        ),
    )(ctx_bf16, wfused, bfused)

    start_logits = start3[:B, 0, :]                       # (B, T)
    end_logits = end3[:B, 0, :]                           # (B, T)
    answer_start_index = aux[:B, 0, 0].astype(jnp.int32)  # (B,)
    answer_end_index = aux[:B, 0, 1]                      # (B,) float, like the torch reference
    pred_label = aux[:B, 0, 2].astype(jnp.int32)          # (B,)
    no_answer = aux[:B, 0, 3:5]                           # (B, 2)
    return (start_logits, end_logits, no_answer,
            answer_start_index, answer_end_index, pred_label)


def projector_softmax(x, w, b, *, block_n=64, block_v=512):
    """softmax(x @ W + b, axis=1): rows tiled by block_n, vocab streamed in block_v tiles.

    Defaults (tn=64, tv=512) keep the resident f32 (tn, V_pad) slab + double-buffered bf16
    weight tiles under ~20 MiB for a 30k vocab, so they fit v7x's 32 MiB scoped VMEM while
    cutting weight re-streaming 8x and pipeline-step count 4x vs the old tn=8/tv=128.
    """
    N, H = x.shape
    V = w.shape[1]
    tn, tv = block_n, block_v
    assert tn % 8 == 0 and tv % 128 == 0
    N_pad = -(-N // tn) * tn
    V_pad = -(-V // tv) * tv
    if N_pad != N:
        x = jnp.pad(x, ((0, N_pad - N), (0, 0)))
    b = jnp.reshape(b, (1, V)).astype(jnp.float32)
    if V_pad != V:
        w = jnp.pad(w, ((0, 0), (0, V_pad - V)))
        # -1e30 f32 bias on padded vocab columns -> their softmax probability is exactly 0.
        b = jnp.pad(b, ((0, 0), (0, V_pad - V)), constant_values=-1e30)

    # bf16 operands (f32 accumulation) halve the weight-streaming bandwidth, the dominant
    # cost of this kernel; logits / softmax stay f32.
    x_bf16 = x.astype(jnp.bfloat16)
    w_bf16 = w.astype(jnp.bfloat16)

    n_blocks = N_pad // tn
    out = pl.pallas_call(
        _proj_softmax_kernel,
        out_shape=jax.ShapeDtypeStruct((N_pad, V_pad), jnp.float32),
        grid_spec=pltpu.PrefetchScalarGridSpec(
            num_scalar_prefetch=0,
            grid=(n_blocks, V_pad // tv),
            in_specs=[
                pl.BlockSpec((tn, H), lambda i, j: (i, 0)),
                pl.BlockSpec((H, tv), lambda i, j: (0, j)),
                pl.BlockSpec((1, tv), lambda i, j: (0, j)),
            ],
            out_specs=pl.BlockSpec((tn, V_pad), lambda i, j: (i, 0)),
        ),
        compiler_params=pltpu.CompilerParams(
            dimension_semantics=("parallel", "arbitrary"),
            vmem_limit_bytes=32 * 1024 * 1024,
        ),
        cost_estimate=pl.CostEstimate(
            flops=2 * N_pad * H * V_pad,
            transcendentals=N_pad * V_pad,
            # x is fetched once per row block (j-invariant index map); weights/bias are
            # re-streamed once per row block; output written once.
            bytes_accessed=(2 * N_pad * H + n_blocks * (2 * H * V_pad + 4 * V_pad)
                            + 4 * N_pad * V_pad),
        ),
    )(x_bf16, w_bf16, b)
    return out[:N, :V]


# -------------------------------------------------------------- host-side glue (lists) ---

def convert_msk_index(begin_list, end_list, exception_list):
    converted_list, idx_list = [], []
    for i in range(len(end_list)):
        temp = []
        for idx in range(begin_list[i], end_list[i] + 1):
            if idx != -1 and idx not in exception_list:
                temp.append(idx)
            else:
                break
        if temp:
            idx_list.append(i)
            converted_list.append(temp)
    return idx_list, converted_list


def flat_output(hidden, have_answer_idx, msk_index_converted):
    rows = []
    for pos, batch_idx in enumerate(have_answer_idx):
        for msk_idx in msk_index_converted[pos]:
            rows.append(hidden[batch_idx, msk_idx])
    if not rows:
        return jnp.zeros((0, hidden.shape[-1]), jnp.float32)
    return jnp.stack(rows, axis=0)


# -------------------------------------------------------------------------------- main ---

if __name__ == "__main__":
    B, T, H, V = 2, 8, 32, 128   # batch, seq, hidden, (synthetic) vocab size

    key = jax.random.PRNGKey(0)
    ks = jax.random.split(key, 8)

    # TODO(synk): the two pretrained HF BERT encoders and the tokenizer/regex span matching
    # (get_index, idx_begin/idx_end) have no Pallas equivalent; hidden states and span labels
    # are deterministic synthetic stand-ins.
    contextual = jax.random.normal(ks[0], (B, T, H), jnp.float32)   # bert_model_contextual(...)
    bert_hidden = jax.random.normal(ks[1], (B, T, H), jnp.float32)  # bert_model(...)

    wb_w = 0.1 * jax.random.normal(ks[2], (H, 1), jnp.float32)
    wb_b = jnp.zeros((1, 1), jnp.float32)
    we_w = 0.1 * jax.random.normal(ks[3], (2 * H, 1), jnp.float32)
    we_b = jnp.zeros((1, 1), jnp.float32)
    cls_w = 0.1 * jax.random.normal(ks[4], (H, 2), jnp.float32)
    cls_b = jnp.zeros((1, 2), jnp.float32)
    proj_w = 0.1 * jax.random.normal(ks[5], (H, V), jnp.float32)
    proj_b = jnp.zeros((1, V), jnp.float32)

    begin_label = [1, 2]
    end_label = [3, 2]
    answer_label = jnp.array([1, 0], jnp.int32)
    idx_begin = [0] * B            # stand-in for tokenizer-derived begin_label_ori
    idx_end = [0] * B              # stand-in for tokenizer-derived end_label_ori
    exception_list = []

    (start_logits, end_logits, no_answer,
     answer_start_index, answer_end_index, pred_label) = qa_head(
        contextual, wb_w, wb_b, we_w, we_b, cls_w, cls_b)

    have_answer_list, msk_index_converted = convert_msk_index(
        begin_label, end_label, exception_list)
    bert_gt = flat_output(bert_hidden, have_answer_list, msk_index_converted)
    contextual_prediction = flat_output(contextual, have_answer_list, msk_index_converted)

    if bert_gt.shape[0] == 0 or contextual_prediction.shape[0] == 0:
        bert_gt_output = bert_gt
        contextual_prediction_output = contextual_prediction
        contain_valid_value = 0
    else:
        bert_gt_output = projector_softmax(bert_gt, proj_w, proj_b)
        contextual_prediction_output = projector_softmax(contextual_prediction, proj_w, proj_b)
        contain_valid_value = 1

    result = {
        'contain_valid_value': contain_valid_value,
        'no_answer_output': no_answer,
        'answer_label': answer_label,
        'start_logit': start_logits,
        'end_logit': end_logits,
        'bert_gt_output': bert_gt_output,
        'contextual_prediction_output': contextual_prediction_output,
        'pred_begin_idx': answer_start_index,
        'pred_end_idx': answer_end_index,
        'begin_label_ori': jnp.asarray(idx_begin, jnp.int32),
        'end_label_ori': jnp.asarray(idx_end, jnp.int32),
    }

    jax.block_until_ready((start_logits, end_logits, no_answer, answer_start_index,
                           answer_end_index, pred_label, bert_gt_output,
                           contextual_prediction_output))

    # ---------------------------------------------------- pure-jnp reference check ---
    # Kernels stream bf16 operands with f32 accumulation, so the reference applies the same
    # operand quantization (bf16 round-trip) and then does exact f32 math.
    def q(a):
        return a.astype(jnp.bfloat16).astype(jnp.float32)

    ctx_q, wb_q, we_q, cls_q = q(contextual), q(wb_w), q(we_w), q(cls_w)

    sl_ref = (ctx_q @ wb_q + wb_b)[..., 0]                                    # (B, T)
    sidx_ref = jnp.argmax(sl_ref, axis=-1)
    hs_ref = ctx_q[jnp.arange(B), sidx_ref]                                   # (B, H)
    el_ref = (ctx_q @ we_q[H:2 * H])[..., 0] + hs_ref @ we_q[0:H] + we_b[0, 0]
    tail = jnp.arange(T)[None, :] >= sidx_ref[:, None]
    eidx_ref = jnp.argmax(jnp.where(tail, el_ref, -1e30), axis=-1).astype(jnp.float32)
    na_ref = ctx_q[:, 0, :] @ cls_q + cls_b
    proj_ref = jax.nn.softmax(q(bert_gt) @ q(proj_w) + proj_b, axis=1)

    assert jnp.allclose(start_logits, sl_ref, atol=1e-3, rtol=1e-3)
    assert jnp.allclose(end_logits, el_ref, atol=1e-3, rtol=1e-3)
    assert jnp.allclose(no_answer, na_ref, atol=1e-3, rtol=1e-3)
    assert jnp.array_equal(answer_start_index, sidx_ref.astype(jnp.int32))
    assert jnp.allclose(answer_end_index, eidx_ref)
    assert jnp.array_equal(pred_label, jnp.argmax(na_ref, axis=1).astype(jnp.int32))
    assert jnp.allclose(bert_gt_output, proj_ref, atol=1e-3, rtol=1e-3)
    assert result['start_logit'].shape == (B, T)
    assert result['bert_gt_output'].shape[1] == V
    print("KERNEL_OK")
</pallas_src>

<mosaic_0001>
module attributes {stable_mosaic.version = 11 : i64} {
  func.func @_qa_head_kernel(%arg0: i32, %arg1: memref<1x8x32xbf16, #tpu.memory_space<vmem>>, %arg2: memref<32x128xbf16, #tpu.memory_space<vmem>>, %arg3: memref<8x1xf32, #tpu.memory_space<vmem>>, %arg4: memref<1x1x8xf32, #tpu.memory_space<vmem>>, %arg5: memref<1x1x8xf32, #tpu.memory_space<vmem>>, %arg6: memref<1x1x128xf32, #tpu.memory_space<vmem>>, %arg7: memref<8x128xf32, #tpu.memory_space<vmem>>, %arg8: memref<8x8xf32, #tpu.memory_space<vmem>>) attributes {dimension_semantics = [#tpu.dimension_semantics<parallel>], iteration_bounds = array<i64: 2>, scalar_prefetch = 0 : i64, scratch_operands = 2 : i64, tpu.core_type = #tpu.core_type<tc>, window_params = [{transform_indices = @transform_0, window_bounds = array<i64: 1, 8, 32>}, {pipeline_mode = #tpu.pipeline_mode<synchronous>, transform_indices = @transform_1, window_bounds = array<i64: 32, 128>}, {pipeline_mode = #tpu.pipeline_mode<synchronous>, transform_indices = @transform_2, window_bounds = array<i64: 8, 1>}, {transform_indices = @transform_3, window_bounds = array<i64: 1, 1, 8>}, {transform_indices = @transform_4, window_bounds = array<i64: 1, 1, 8>}, {transform_indices = @transform_5, window_bounds = array<i64: 1, 1, 128>}]} {
    %c0 = arith.constant 0 : index
    %c0_0 = arith.constant 0 : index
    %c0_1 = arith.constant 0 : index
    %0 = vector.load %arg1[%c0, %c0_0, %c0_1] : memref<1x8x32xbf16, #tpu.memory_space<vmem>>, vector<1x8x32xbf16>
    %1 = vector.shape_cast %0 : vector<1x8x32xbf16> to vector<8x32xbf16>
    %c0_2 = arith.constant 0 : index
    %c0_3 = arith.constant 0 : index
    %2 = vector.load %arg2[%c0_2, %c0_3] : memref<32x128xbf16, #tpu.memory_space<vmem>>, vector<32x128xbf16>
    %cst = arith.constant dense<0.000000e+00> : vector<8x128xf32>
    %3 = tpu.matmul %1, %2, %cst {dimension_numbers = #tpu.dot_dimension_numbers<[1], [0], [0], [1], [0, 0, 1, 1], [], []>} : vector<8x32xbf16>, vector<32x128xbf16>, vector<8x128xf32> -> vector<8x128xf32>
    %c0_4 = arith.constant 0 : index
    %c0_5 = arith.constant 0 : index
    %4 = vector.load %arg7[%c0_4, %c0_5] : memref<8x128xf32, #tpu.memory_space<vmem>>, vector<8x128xf32>
    tpu.vector_store %arg7[%c0_4, %c0_5], %3 {strides = array<i32>} : memref<8x128xf32, #tpu.memory_space<vmem>>, vector<8x128xf32>,
    %c0_6 = arith.constant 0 : index
    %c0_7 = arith.constant 0 : index
    %5 = vector.load %arg7[%c0_6, %c0_7] : memref<8x128xf32, #tpu.memory_space<vmem>>, vector<8x8xf32>
    %6 = tpu.transpose %5, [1, 0] : vector<8x8xf32> -> vector<8x8xf32>
    %c0_8 = arith.constant 0 : index
    %c0_9 = arith.constant 0 : index
    %7 = vector.load %arg3[%c0_8, %c0_9] : memref<8x1xf32, #tpu.memory_space<vmem>>, vector<8x1xf32>
    %8 = vector.broadcast %7 : vector<8x1xf32> to vector<8x8xf32>
    %9 = arith.addf %6, %8 : vector<8x8xf32>
    %c0_10 = arith.constant 0 : index
    %c0_11 = arith.constant 0 : index
    %10 = vector.load %arg8[%c0_10, %c0_11] : memref<8x8xf32, #tpu.memory_space<vmem>>, vector<8x8xf32>
    tpu.vector_store %arg8[%c0_10, %c0_11], %9 {strides = array<i32>} : memref<8x8xf32, #tpu.memory_space<vmem>>, vector<8x8xf32>,
    %11 = tpu.iota {dimensions = array<i32: 1>} : vector<1x8xi32>
    %12 = tpu.iota {dimensions = array<i32: 1>} : vector<1x128xi32>
    %c0_12 = arith.constant 0 : index
    %c0_13 = arith.constant 0 : index
    %13 = vector.load %arg8[%c0_12, %c0_13] : memref<8x8xf32, #tpu.memory_space<vmem>>, vector<8x8xf32>
    %14 = vector.extract_strided_slice %13 {offsets = [0, 0], sizes = [1, 8], strides = [1, 1]} : vector<8x8xf32> to vector<1x8xf32>
    %15 = vector.extract_strided_slice %13 {offsets = [1, 0], sizes = [1, 8], strides = [1, 1]} : vector<8x8xf32> to vector<1x8xf32>
    %16 = vector.extract_strided_slice %13 {offsets = [2, 0], sizes = [1, 8], strides = [1, 1]} : vector<8x8xf32> to vector<1x8xf32>
    %cst_14 = arith.constant dense<0xFF800000> : vector<1xf32>
    %17 = vector.multi_reduction <maximumf>, %14, %cst_14 [1] : vector<1x8xf32> to vector<1xf32>
    %18 = vector.shape_cast %17 : vector<1xf32> to vector<1x1xf32>
    %19 = vector.broadcast %18 : vector<1x1xf32> to vector<1x8xf32>
    %20 = arith.cmpf oeq, %14, %19 : vector<1x8xf32>
    %c8_i32 = arith.constant 8 : i32
    %21 = vector.broadcast %c8_i32 : i32 to vector<1x8xi32>
    %22 = arith.select %20, %11, %21 : vector<1x8xi1>, vector<1x8xi32>
    %cst_15 = arith.constant dense<2147483647> : vector<1xi32>
    %23 = vector.multi_reduction <minsi>, %22, %cst_15 [1] : vector<1x8xi32> to vector<1xi32>
    %24 = vector.shape_cast %23 : vector<1xi32> to vector<1x1xi32>
    %25 = vector.broadcast %24 : vector<1x1xi32> to vector<1x8xi32>
    %26 = arith.cmpi eq, %11, %25 : vector<1x8xi32>
    %cst_16 = arith.constant 0.000000e+00 : f32
    %27 = vector.broadcast %cst_16 : f32 to vector<1x8xf32>
    %28 = arith.select %26, %16, %27 : vector<1x8xi1>, vector<1x8xf32>
    %cst_17 = arith.constant dense<0.000000e+00> : vector<1xf32>
    %29 = vector.multi_reduction <add>, %28, %cst_17 [1] : vector<1x8xf32> to vector<1xf32>
    %30 = vector.shape_cast %29 : vector<1xf32> to vector<1x1xf32>
    %31 = vector.broadcast %30 : vector<1x1xf32> to vector<1x8xf32>
    %32 = arith.addf %15, %31 : vector<1x8xf32>
    %33 = vector.broadcast %24 : vector<1x1xi32> to vector<1x8xi32>
    %34 = arith.cmpi sge, %11, %33 : vector<1x8xi32>
    %cst_18 = arith.constant -1.000000e+30 : f32
    %35 = vector.broadcast %cst_18 : f32 to vector<1x8xf32>
    %36 = arith.select %34, %32, %35 : vector<1x8xi1>, vector<1x8xf32>
    %cst_19 = arith.constant dense<0xFF800000> : vector<1xf32>
    %37 = vector.multi_reduction <maximumf>, %36, %cst_19 [1] : vector<1x8xf32> to vector<1xf32>
    %38 = vector.shape_cast %37 : vector<1xf32> to vector<1x1xf32>
    %39 = vector.broadcast %38 : vector<1x1xf32> to vector<1x8xf32>
    %40 = arith.cmpf oeq, %36, %39 : vector<1x8xf32>
    %c8_i32_20 = arith.constant 8 : i32
    %41 = vector.broadcast %c8_i32_20 : i32 to vector<1x8xi32>
    %42 = arith.select %40, %11, %41 : vector<1x8xi1>, vector<1x8xi32>
    %cst_21 = arith.constant dense<2147483647> : vector<1xi32>
    %43 = vector.multi_reduction <minsi>, %42, %cst_21 [1] : vector<1x8xi32> to vector<1xi32>
    %44 = vector.shape_cast %43 : vector<1xi32> to vector<1x1xi32>
    %45 = vector.extract_strided_slice %13 {offsets = [3, 0], sizes = [1, 1], strides = [1, 1]} : vector<8x8xf32> to vector<1x1xf32>
    %46 = vector.extract_strided_slice %13 {offsets = [4, 0], sizes = [1, 1], strides = [1, 1]} : vector<8x8xf32> to vector<1x1xf32>
    %47 = arith.cmpf ogt, %46, %45 : vector<1x1xf32>
    %48 = arith.extui %47 : vector<1x1xi1> to vector<1x1xi32>
    %49 = arith.sitofp %48 : vector<1x1xi32> to vector<1x1xf32>
    %c0_22 = arith.constant 0 : index
    %c0_23 = arith.constant 0 : index
    %c0_24 = arith.constant 0 : index
    %50 = vector.load %arg4[%c0_22, %c0_23, %c0_24] : memref<1x1x8xf32, #tpu.memory_space<vmem>>, vector<1x1x8xf32>
    %51 = vector.shape_cast %50 : vector<1x1x8xf32> to vector<1x8xf32>
    %52 = vector.shape_cast %14 : vector<1x8xf32> to vector<1x1x8xf32>
    tpu.vector_store %arg4[%c0_22, %c0_23, %c0_24], %52 {strides = array<i32>} : memref<1x1x8xf32, #tpu.memory_space<vmem>>, vector<1x1x8xf32>,
    %c0_25 = arith.constant 0 : index
    %c0_26 = arith.constant 0 : index
    %c0_27 = arith.constant 0 : index
    %53 = vector.load %arg5[%c0_25, %c0_26, %c0_27] : memref<1x1x8xf32, #tpu.memory_space<vmem>>, vector<1x1x8xf32>
    %54 = vector.shape_cast %53 : vector<1x1x8xf32> to vector<1x8xf32>
    %55 = vector.shape_cast %32 : vector<1x8xf32> to vector<1x1x8xf32>
    tpu.vector_store %arg5[%c0_25, %c0_26, %c0_27], %55 {strides = array<i32>} : memref<1x1x8xf32, #tpu.memory_space<vmem>>, vector<1x1x8xf32>,
    %c0_i32 = arith.constant 0 : i32
    %56 = vector.broadcast %c0_i32 : i32 to vector<1x128xi32>
    %57 = arith.cmpi eq, %12, %56 : vector<1x128xi32>
    %58 = arith.sitofp %24 : vector<1x1xi32> to vector<1x1xf32>
    %c1_i32 = arith.constant 1 : i32
    %59 = vector.broadcast %c1_i32 : i32 to vector<1x128xi32>
    %60 = arith.cmpi eq, %12, %59 : vector<1x128xi32>
    %61 = arith.sitofp %44 : vector<1x1xi32> to vector<1x1xf32>
    %c2_i32 = arith.constant 2 : i32
    %62 = vector.broadcast %c2_i32 : i32 to vector<1x128xi32>
    %63 = arith.cmpi eq, %12, %62 : vector<1x128xi32>
    %c3_i32 = arith.constant 3 : i32
    %64 = vector.broadcast %c3_i32 : i32 to vector<1x128xi32>
    %65 = arith.cmpi eq, %12, %64 : vector<1x128xi32>
    %c4_i32 = arith.constant 4 : i32
    %66 = vector.broadcast %c4_i32 : i32 to vector<1x128xi32>
    %67 = arith.cmpi eq, %12, %66 : vector<1x128xi32>
    %cst_28 = arith.constant 0.000000e+00 : f32
    %68 = vector.shape_cast %46 : vector<1x1xf32> to vector<1x1xf32>
    %69 = vector.broadcast %68 : vector<1x1xf32> to vector<1x128xf32>
    %70 = vector.broadcast %cst_28 : f32 to vector<1x128xf32>
    %71 = arith.select %67, %69, %70 : vector<1x128xi1>, vector<1x128xf32>
    %72 = vector.shape_cast %45 : vector<1x1xf32> to vector<1x1xf32>
    %73 = vector.broadcast %72 : vector<1x1xf32> to vector<1x128xf32>
    %74 = arith.select %65, %73, %71 : vector<1x128xi1>, vector<1x128xf32>
    %75 = vector.shape_cast %49 : vector<1x1xf32> to vector<1x1xf32>
    %76 = vector.broadcast %75 : vector<1x1xf32> to vector<1x128xf32>
    %77 = arith.select %63, %76, %74 : vector<1x128xi1>, vector<1x128xf32>
    %78 = vector.shape_cast %61 : vector<1x1xf32> to vector<1x1xf32>
    %79 = vector.broadcast %78 : vector<1x1xf32> to vector<1x128xf32>
    %80 = arith.select %60, %79, %77 : vector<1x128xi1>, vector<1x128xf32>
    %81 = vector.shape_cast %58 : vector<1x1xf32> to vector<1x1xf32>
    %82 = vector.broadcast %81 : vector<1x1xf32> to vector<1x128xf32>
    %83 = arith.select %57, %82, %80 : vector<1x128xi1>, vector<1x128xf32>
    %c0_29 = arith.constant 0 : index
    %c0_30 = arith.constant 0 : index
    %c0_31 = arith.constant 0 : index
    %84 = vector.load %arg6[%c0_29, %c0_30, %c0_31] : memref<1x1x128xf32, #tpu.memory_space<vmem>>, vector<1x1x128xf32>
    %85 = vector.shape_cast %84 : vector<1x1x128xf32> to vector<1x128xf32>
    %86 = vector.shape_cast %83 : vector<1x128xf32> to vector<1x1x128xf32>
    tpu.vector_store %arg6[%c0_29, %c0_30, %c0_31], %86 {strides = array<i32>} : memref<1x1x128xf32, #tpu.memory_space<vmem>>, vector<1x1x128xf32>,
    return
  }
  func.func @transform_0(%arg0: i32) -> (i32, i32, i32) {
    %c0_i32 = arith.constant 0 : i32
    %c0_i32_0 = arith.constant 0 : i32
    %c0_i32_1 = arith.constant 0 : i32
    return %arg0, %c0_i32, %c0_i32_0 : i32, i32, i32
  }
  func.func @transform_1(%arg0: i32) -> (i32, i32) {
    %c0_i32 = arith.constant 0 : i32
    %c0_i32_0 = arith.constant 0 : i32
    %c0_i32_1 = arith.constant 0 : i32
    return %c0_i32, %c0_i32_0 : i32, i32
  }
  func.func @transform_2(%arg0: i32) -> (i32, i32) {
    %c0_i32 = arith.constant 0 : i32
    %c0_i32_0 = arith.constant 0 : i32
    %c0_i32_1 = arith.constant 0 : i32
    return %c0_i32, %c0_i32_0 : i32, i32
  }
  func.func @transform_3(%arg0: i32) -> (i32, i32, i32) {
    %c0_i32 = arith.constant 0 : i32
    %c0_i32_0 = arith.constant 0 : i32
    %c0_i32_1 = arith.constant 0 : i32
    return %arg0, %c0_i32, %c0_i32_0 : i32, i32, i32
  }
  func.func @transform_4(%arg0: i32) -> (i32, i32, i32) {
    %c0_i32 = arith.constant 0 : i32
    %c0_i32_0 = arith.constant 0 : i32
    %c0_i32_1 = arith.constant 0 : i32
    return %arg0, %c0_i32, %c0_i32_0 : i32, i32, i32
  }
  func.func @transform_5(%arg0: i32) -> (i32, i32, i32) {
    %c0_i32 = arith.constant 0 : i32
    %c0_i32_0 = arith.constant 0 : i32
    %c0_i32_1 = arith.constant 0 : i32
    return %arg0, %c0_i32, %c0_i32_0 : i32, i32, i32
  }
}

</mosaic_0001>

<llo_original>
// kernel: tpu_custom_call.1
$region0: #{tpu_custom_call.1}
  #allocation0 [shape = 'u32[]', space=smem, size = 0x4, offset = 0x4, fixed_abs, tag = 'smem constant byte address 0x4 - core index']
  #allocation1 [shape = 'u32[72,128]{1,0:T(1,128)}', space=vmem, size = 0x9000, scoped, tag = 'internal scratch']
  #allocation2 [shape = 'f32[8,128]{1,0:T(8,128)}', space=vmem, size = 0x1000, scoped, tag = 'scratch operand']
  #allocation3 [shape = 'f32[8,8]{1,0:T(8,128)}', space=vmem, size = 0x1000, scoped, tag = 'scratch operand']
  %s0 = inlined_call_operand.vmem [shape: bf16[2,8,32], index: 0, kind: input, shape index: {}]
  %s1 = inlined_call_operand.hbm [shape: bf16[32,128], index: 1, kind: input, shape index: {}]
  %s2 = inlined_call_operand.vmem [shape: f32[8,1], index: 2, kind: input, shape index: {}]
  %s3 = inlined_call_operand.hbm [shape: f32[2,1,8], index: 3, kind: output, shape index: {0}]
  %s4 = inlined_call_operand.hbm [shape: f32[2,1,8], index: 4, kind: output, shape index: {1}]
  %s5 = inlined_call_operand.hbm [shape: f32[2,1,128], index: 5, kind: output, shape index: {2}]
  %6 = xla_tuple %s3, %s4, %s5
  %s7 = sld [smem:[#allocation0]]
  $region65: #{tpu_custom_call.1} parent=0
    _
  %s9 = ssub.s32 1, %s7
  %s10 = scalar_select 0, %s9, %s7
  $region1: #{tpu_custom_call.1} parent=0
    #allocation4 [shape = 'u8[8192]{0}', space=vmem, size = 0x2000, scoped, tag = 'input window, operand 1, single buffered']
    #allocation5 [shape = 's32[2]{0}', space=sflag, size = 0x8, scoped, tag = 'scoped memory for tpu_custom_call.1']
    #allocation6 [shape = 's32[2]{0}', space=sflag, size = 0x8, scoped, tag = 'scoped memory for tpu_custom_call.1']
    #allocation7 [shape = 'u8[1024]{0}', space=vmem, size = 0x400, scoped, tag = 'output window, operand 0']
    #allocation8 [shape = 'u8[1024]{0}', space=vmem, size = 0x400, scoped, tag = 'output window, operand 1']
    #allocation9 [shape = 's32[2]{0}', space=sflag, size = 0x8, scoped, tag = 'scoped memory for tpu_custom_call.1']
    #allocation10 [shape = 'u8[1024]{0}', space=vmem, size = 0x400, scoped, tag = 'output window, operand 2']
    %11 = vsyncpa [#allocation5], 0
    %12 = vsyncpa [#allocation6], 0
    %s13 = scalar_lea.sflag [#allocation6], 1
    %14 = vsyncpa %s13, 0
    %15 = vsyncpa [#allocation9], 0
    %s16 = scalar_lea.sflag [#allocation9], 1
    %17 = vsyncpa %s16, 0
    loop: start=0, step=1, limit=4
    $region2: #{tpu_custom_call.1} parent=1 // loop_pre_header
      _
    $region3: #{tpu_custom_call.1} parent=1 // loop_header
      %s19 = sphi 0, %s23
      %p20 = scmp.ge.s32.totalorder %s19, 4
      %s29 = sphi 0, %s31
      %s32 = sphi 0, %s29
      %s33 = sphi 0, %s32
      %s49 = sphi 0, %s33
      %s53 = sphi 0, %s53
      %s55 = sphi 0, %s53
      %s56 = sphi 0, %s55
      %s70 = sphi 0, %s56
      %s74 = sphi 0, %s74
      %s76 = sphi 0, %s74
      %s77 = sphi 0, %s76
      %s91 = sphi 0, %s77
      %s97 = sphi 0, %s99
      %s100 = sphi 0, %s97
      %s101 = sphi 0, %s100
      %s117 = sphi 0, %s101
      %s123 = sphi 0, %s125
      %s126 = sphi 0, %s123
      %s127 = sphi 0, %s126
      %s143 = sphi 0, %s127
      %s149 = sphi 0, %s151
      %s152 = sphi 0, %s149
      %s153 = sphi 0, %s152
      %s169 = sphi 0, %s153
    $region4: #{tpu_custom_call.1} parent=1 // loop_header_branch
      %22 = sbr.rel (%p20) target = $region8
    $region5: #{tpu_custom_call.1} parent=1 // loop_body
      %s24 = ssub.s32 %s19, 1
      %s25 = ssub.s32 %s19, 2
      %s26 = sadd.s32 %s19, 1
      %s27 = ssub.s32 %s19, %s26
      %p28 = scmp.eq.s32.totalorder %s27, 0
      %s30 = sadd.s32 %s29, 1
      %s31 = scalar_select %p28, %s29, %s30
      %p34 = pneg %p28
      %p35 = scmp.eq.s32.totalorder %s19, 1
      %p36 = por %p34, %p35
      %p37 = scmp.ne.s32.totalorder %s29, %s32
      %p38 = scmp.eq.s32.totalorder %s19, 0
      %p39 = por %p37, %p38
      %p40 = scmp.ne.s32.totalorder %s29, %s32
      %p41 = scmp.eq.s32.totalorder %s24, 1
      %p42 = por %p40, %p41
      %p43 = scmp.ne.s32.totalorder %s32, %s33
      %p44 = scmp.eq.s32.totalorder %s24, 0
      %p45 = por %p43, %p44
      %p46 = scmp.ne.s32.totalorder %s32, %s33
      %p47 = scmp.eq.s32.totalorder %s25, 1
      %p48 = por %p46, %p47
      %p50 = scmp.ne.s32.totalorder %s33, %s49
      %p51 = scmp.eq.s32.totalorder %s25, 0
      %p52 = por %p50, %p51
      %s54 = sadd.s32 %s53, 1
      %p57 = scmp.eq.s32.totalorder %s19, 1
      %p58 = scmp.ne.s32.totalorder %s53, %s55
      %p59 = scmp.eq.s32.totalorder %s19, 0
      %p60 = por %p58, %p59
      %p61 = scmp.ne.s32.totalorder %s53, %s55
      %p62 = scmp.eq.s32.totalorder %s24, 1
      %p63 = por %p61, %p62
      %p64 = scmp.ne.s32.totalorder %s55, %s56
      %p65 = scmp.eq.s32.totalorder %s24, 0
      %p66 = por %p64, %p65
      %p67 = scmp.ne.s32.totalorder %s55, %s56
      %p68 = scmp.eq.s32.totalorder %s25, 1
      %p69 = por %p67, %p68
      %p71 = scmp.ne.s32.totalorder %s56, %s70
      %p72 = scmp.eq.s32.totalorder %s25, 0
      %p73 = por %p71, %p72
      %s75 = sadd.s32 %s74, 1
      %p78 = scmp.eq.s32.totalorder %s19, 1
      %p79 = scmp.ne.s32.totalorder %s74, %s76
      %p80 = scmp.eq.s32.totalorder %s19, 0
      %p81 = por %p79, %p80
      %p82 = scmp.ne.s32.totalorder %s74, %s76
      %p83 = scmp.eq.s32.totalorder %s24, 1
      %p84 = por %p82, %p83
      %p85 = scmp.ne.s32.totalorder %s76, %s77
      %p86 = scmp.eq.s32.totalorder %s24, 0
      %p87 = por %p85, %p86
      %p88 = scmp.ne.s32.totalorder %s76, %s77
      %p89 = scmp.eq.s32.totalorder %s25, 1
      %p90 = por %p88, %p89
      %p92 = scmp.ne.s32.totalorder %s77, %s91
      %p93 = scmp.eq.s32.totalorder %s25, 0
      %p94 = por %p92, %p93
      %s95 = ssub.s32 %s19, %s26
      %p96 = scmp.eq.s32.totalorder %s95, 0
      %s98 = sadd.s32 %s97, 1
      %s99 = scalar_select %p96, %s97, %s98
      %p102 = pneg %p96
      %p103 = scmp.eq.s32.totalorder %s19, 1
      %p104 = por %p102, %p103
      %p105 = scmp.ne.s32.totalorder %s97, %s100
      %p106 = scmp.eq.s32.totalorder %s19, 0
      %p107 = por %p105, %p106
      %p108 = scmp.ne.s32.totalorder %s97, %s100
      %p109 = scmp.eq.s32.totalorder %s24, 1
      %p110 = por %p108, %p109
      %p111 = scmp.ne.s32.totalorder %s100, %s101
      %p112 = scmp.eq.s32.totalorder %s24, 0
      %p113 = por %p111, %p112
      %p114 = scmp.ne.s32.totalorder %s100, %s101
      %p115 = scmp.eq.s32.totalorder %s25, 1
      %p116 = por %p114, %p115
      %p118 = scmp.ne.s32.totalorder %s101, %s117
      %p119 = scmp.eq.s32.totalorder %s25, 0
      %p120 = por %p118, %p119
      %s121 = ssub.s32 %s19, %s26
      %p122 = scmp.eq.s32.totalorder %s121, 0
      %s124 = sadd.s32 %s123, 1
      %s125 = scalar_select %p122, %s123, %s124
      %p128 = pneg %p122
      %p129 = scmp.eq.s32.totalorder %s19, 1
      %p130 = por %p128, %p129
      %p131 = scmp.ne.s32.totalorder %s123, %s126
      %p132 = scmp.eq.s32.totalorder %s19, 0
      %p133 = por %p131, %p132
      %p134 = scmp.ne.s32.totalorder %s123, %s126
      %p135 = scmp.eq.s32.totalorder %s24, 1
      %p136 = por %p134, %p135
      %p137 = scmp.ne.s32.totalorder %s126, %s127
      %p138 = scmp.eq.s32.totalorder %s24, 0
      %p139 = por %p137, %p138
      %p140 = scmp.ne.s32.totalorder %s126, %s127
      %p141 = scmp.eq.s32.totalorder %s25, 1
      %p142 = por %p140, %p141
      %p144 = scmp.ne.s32.totalorder %s127, %s143
      %p145 = scmp.eq.s32.totalorder %s25, 0
      %p146 = por %p144, %p145
      %s147 = ssub.s32 %s19, %s26
      %p148 = scmp.eq.s32.totalorder %s147, 0
      %s150 = sadd.s32 %s149, 1
      %s151 = scalar_select %p148, %s149, %s150
      %p154 = pneg %p148
      %p155 = scmp.eq.s32.totalorder %s19, 1
      %p156 = por %p154, %p155
      %p157 = scmp.ne.s32.totalorder %s149, %s152
      %p158 = scmp.eq.s32.totalorder %s19, 0
      %p159 = por %p157, %p158
      %p160 = scmp.ne.s32.totalorder %s149, %s152
      %p161 = scmp.eq.s32.totalorder %s24, 1
      %p162 = por %p160, %p161
      %p163 = scmp.ne.s32.totalorder %s152, %s153
      %p164 = scmp.eq.s32.totalorder %s24, 0
      %p165 = por %p163, %p164
      %p166 = scmp.ne.s32.totalorder %s152, %s153
      %p167 = scmp.eq.s32.totalorder %s25, 1
      %p168 = por %p166, %p167
      %p170 = scmp.ne.s32.totalorder %s153, %s169
      %p171 = scmp.eq.s32.totalorder %s25, 0
      %p172 = por %p170, %p171
      %p173 = scmp.le.s32.totalorder 1, %s19
      %p174 = scmp.lt.s32.totalorder %s19, 3
      %p175 = pnand %p173, %p174
      %p176 = pneg %p175
      // Predicated region
      $region9: #{tpu_custom_call.1} parent=5 // pred_check
        _
      $region10: #{tpu_custom_call.1} parent=5 // pred_check_branch
        %178 = sbr.rel (%p175) target = $region12
      $region11: #{tpu_custom_call.1} parent=5 // pred_region
        %s179 = ssub.s32 %s19, 1
        // Predicated region
        $region13: #{tpu_custom_call.1} parent=11 // pred_check
          %p180 = pneg %p66
        $region14: #{tpu_custom_call.1} parent=11 // pred_check_branch
          %182 = sbr.rel (%p180) target = $region16
        $region15: #{tpu_custom_call.1} parent=11 // pred_region
          %184 = vsyncadd [#allocation5], 0
          %s185 = sshll.u32 %s1, 4
          %s186 = int_to_ptr.hbm [resolvable:$true] %s185
          %s187 = sshll.u32 [#allocation4], 4
          %s188 = int_to_ptr.vmem [resolvable:$true] %s187
          %193 = dma.hbm_to_vmem [thread:$0]  %s186, 256, %s188, [#allocation5], 64, 64, 4
        $region16: #{tpu_custom_call.1} parent=11 // pred_fallthru
          _
        // Predicated region
        $region17: #{tpu_custom_call.1} parent=11 // pred_check
          %p194 = pneg %p87
        $region18: #{tpu_custom_call.1} parent=11 // pred_check_branch
          %196 = sbr.rel (%p194) target = $region20
        $region19: #{tpu_custom_call.1} parent=11 // pred_region
          _
        $region20: #{tpu_custom_call.1} parent=11 // pred_fallthru
          _
      $region12: #{tpu_custom_call.1} parent=5 // pred_fallthru
        _
      %p197 = scmp.lt.s32.totalorder %s19, 2
      // Predicated region
      $region21: #{tpu_custom_call.1} parent=5 // pred_check
        %p198 = pneg %p197
      $region22: #{tpu_custom_call.1} parent=5 // pred_check_branch
        %200 = sbr.rel (%p198) target = $region24
      $region23: #{tpu_custom_call.1} parent=5 // pred_region
        // Predicated region
        $region25: #{tpu_custom_call.1} parent=23 // pred_check
          %p201 = pneg %p39
        $region26: #{tpu_custom_call.1} parent=23 // pred_check_branch
          %203 = sbr.rel (%p201) target = $region28
        $region27: #{tpu_custom_call.1} parent=23 // pred_region
          %p204 = scmp.lt.s32.totalorder %s19, 1
          %s205 = scalar_select %p204, %s19, 1
          %s206 = smul.addr %s205, 4
          %s207 = scalar_lea.vmem %s0, %s206
        $region28: #{tpu_custom_call.1} parent=23 // pred_fallthru
          _
      $region24: #{tpu_custom_call.1} parent=5 // pred_fallthru
        _
      %p208 = scmp.le.s32.totalorder 1, %s19
      %p209 = scmp.lt.s32.totalorder %s19, 3
      %p210 = pnand %p208, %p209
      %p211 = pneg %p210
      // Predicated region
      $region29: #{tpu_custom_call.1} parent=5 // pred_check
        _
      $region30: #{tpu_custom_call.1} parent=5 // pred_check_branch
        %213 = sbr.rel (%p210) target = $region32
      $region31: #{tpu_custom_call.1} parent=5 // pred_region
        %s214 = ssub.s32 %s19, 1
        // Predicated region
        $region33: #{tpu_custom_call.1} parent=31 // pred_check
          %p215 = pneg %p66
        $region34: #{tpu_custom_call.1} parent=31 // pred_check_branch
          %217 = sbr.rel (%p215) target = $region36
        $region35: #{tpu_custom_call.1} parent=31 // pred_region
          %219 = dma.done [#allocation5], 256
        $region36: #{tpu_custom_call.1} parent=31 // pred_fallthru
          _
        %p220 = scmp.lt.s32.totalorder %s24, 1
        %s221 = scalar_select %p220, %s24, 1
        %s222 = smul.addr %s221, 4
        %s223 = scalar_lea.vmem %s0, %s222
        %p224 = pneg %p45
        %p225 = pneg %p42
        %p226 = pneg %p66
        %p227 = pneg %p63
        %p228 = pneg %p87
        %p229 = pneg %p84
        %p230 = pneg %p113
        %p231 = pneg %p110
        %s232 = sand.u32 %s100, 1
        %s233 = scalar_lea.sflag [#allocation6], %s232
        %s234 = sand.u32 %s100, 1
        %s235 = scalar_lea.vmem [#allocation7], %s234
        %p236 = pneg %p139
        %p237 = pneg %p136
        %s238 = sand.u32 %s24, 1
        %s239 = scalar_lea.sflag [#allocation9], %s238
        %s240 = sand.u32 %s126, 1
        %s241 = scalar_lea.vmem [#allocation8], %s240
        %p242 = pneg %p165
        %p243 = pneg %p162
        %s244 = sand.u32 %s24, 1
        %s245 = scalar_lea.sflag [#allocation9], %s244
        %s246 = sand.u32 %s152, 1
        %s247 = scalar_lea.vmem [#allocation10], %s246
        %p248 = scmp.lt.s32.totalorder %s24, 1
        %s249 = scalar_select %p248, %s24, 1
        %s250 = smul.addr %s249, 4
        %s251 = scalar_lea.vmem %s0, %s250
        %v253 = vld [vmem:[%s251] sm:$0xf]
        %v254 = vld [vmem:[#allocation4] sm:$0xf]
        %v255 = vld [vmem:[#allocation4 + $0x4] sm:$0xf]
        %v256 = vld [vmem:[#allocation4 + $0x8] sm:$0xf]
        %v257 = vld [vmem:[#allocation4 + $0xc] sm:$0xf]
        %v262 = vunpack.c.l.b16 %v254
        %v263 = vunpack.c.l.b16 %v255
        %v264 = vunpack.c.l.b16 %v256
        %v265 = vunpack.c.l.b16 %v257
        %v266 = vpack.c.b16 %v263, %v262
        %v267 = vpack.c.b16 %v265, %v264
        %vm270 = vcmask 261120
        %v272 = vsel %vm270, %v253, 0
        %274 = vmatpush.bf16.msra.mxu0 0
        %275 = vmatpush.bf16.msra.mxu0 0
        %276 = vmatpush.bf16.msra.mxu0 0
        %277 = vmatpush.bf16.msra.mxu0 0
        %278 = vmatpush.bf16.msra.mxu0 0
        %279 = vmatpush.bf16.msra.mxu0 0
        %280 = vmatpush.bf16.msra.mxu0 %v267
        %281 = vmatpush.bf16.msra.mxu0 %v266
        %282 = vmatmul.bf16.gmra.mxu0 %v272
        %v283 = vpop.f32.mrf.mxu0
        %v284 = vadd.f32 0.0, %v283
        %v285 = vpop.f32.mrf.mxu0
        %286 = vdwg.mxu0
        %287 = vst [vmem:[#allocation2] sm:$0xff] %v284
        %v288 = vld [vmem:[#allocation2] sm:$0xff]
        %289 = vxpose.xlu0.b32.start [1/16] %v288, 128
        %290 = vxpose.xlu0.b32.cont [2/16] 0.0, 128
        %291 = vxpose.xlu0.b32.cont [3/16] 0.0, 128
        %292 = vxpose.xlu0.b32.cont [4/16] 0.0, 128
        %293 = vxpose.xlu0.b32.cont [5/16] 0.0, 128
        %294 = vxpose.xlu0.b32.cont [6/16] 0.0, 128
        %295 = vxpose.xlu0.b32.cont [7/16] 0.0, 128
        %296 = vxpose.xlu0.b32.cont [8/16] 0.0, 128
        %297 = vxpose.xlu0.b32.cont [9/16] 0.0, 128
        %298 = vxpose.xlu0.b32.cont [10/16] 0.0, 128
        %299 = vxpose.xlu0.b32.cont [11/16] 0.0, 128
        %300 = vxpose.xlu0.b32.cont [12/16] 0.0, 128
        %301 = vxpose.xlu0.b32.cont [13/16] 0.0, 128
        %302 = vxpose.xlu0.b32.cont [14/16] 0.0, 128
        %303 = vxpose.xlu0.b32.cont [15/16] 0.0, 128
        %304 = vxpose.xlu0.b32.end [16/16] 0.0, 128
        %v305 = vpop.trf.xlu0
        %v306 = vpop.trf.xlu0
        %v307 = vpop.trf.xlu0
        %v308 = vpop.trf.xlu0
        %v309 = vpop.trf.xlu0
        %v310 = vpop.trf.xlu0
        %v311 = vpop.trf.xlu0
        %v312 = vpop.trf.xlu0
        %v313 = vpop.trf.xlu0
        %v314 = vpop.trf.xlu0
        %v315 = vpop.trf.xlu0
        %v316 = vpop.trf.xlu0
        %v317 = vpop.trf.xlu0
        %v318 = vpop.trf.xlu0
        %v319 = vpop.trf.xlu0
        %v320 = vpop.trf.xlu0
        %v321 = vld [vmem:[%s2] sm:$0xff]
        %323 = vset.pattern.permute.xlu0 0
        %324 = vperm.xlu0 %323, %v321
        %v325 = vpop.permute.xlu0 %324
        %v327 = vadd.f32 %v305, %v325
        %vm328 = vcmask 64512
        %329 = vst.msk [vmem:[#allocation3] sm:$0xff] %vm328, %v327
        %v330 = vlaneseq
        %v331 = vand.u32 %v330, 127
        %v332 = vld [vmem:[#allocation3] sm:$0xff]
        %vm333 = vcmask 57344
        %v334 = vsel %vm333, %v332, -inf
        %335 = vmax.xlane.f32.xlu0 %v334
        %v336 = vpop.xlane.xlu0 %335
        %vm337 = vcmp.eq.f32.partialorder %v332, %v336
        %v338 = vsel %vm337, %v331, 8
        %v339 = vsel %vm333, %v338, 2147483647
        %v340 = vand.u32 %v339, 65535
        %v341 = vshra.s32 %v339, 16
        %v342 = vcvt.s32.f32 %v340
        %v343 = vcvt.s32.f32 %v341
        %344 = vmin.xlane.f32.xlu0 %v343
        %v345 = vpop.xlane.xlu0 %344
        %vm346 = vcmp.eq.f32.partialorder %v343, %v345
        %v347 = vsel %vm346, %v342, inf
        %348 = vmin.xlane.f32.xlu0 %v347
        %v349 = vpop.xlane.xlu0 %348
        %v350 = vcvt.f32.s32 %v349
        %v351 = vcvt.f32.s32 %v345
        %v352 = vshll.u32 %v351, 16
        %v353 = vadd.s32 %v352, %v350
        %vm354 = vcmp.eq.s32.totalorder %v331, %v353
        %v356 = vrot.slane %v332, 2
        %v358 = vsel %vm354, %v356, 0.0
        %v359 = vsel %vm333, %v358, 0.0
        %360 = vadd.xlane.f32.xlu0 %v359
        %v361 = vpop.xlane.xlu0 %360
        %v363 = vrot.slane %v361, 7
        %v365 = vadd.f32 %v332, %v363
        %vm366 = vcmp.ge.s32.totalorder %v331, %v353
        %v368 = vrot.slane %v365, 1
        %v370 = vsel %vm366, %v368, -1e+30
        %v371 = vsel %vm333, %v370, -inf
        %372 = vmax.xlane.f32.xlu0 %v371
        %v373 = vpop.xlane.xlu0 %372
        %vm374 = vcmp.eq.f32.partialorder %v370, %v373
        %v375 = vsel %vm374, %v331, 8
        %v376 = vsel %vm333, %v375, 2147483647
        %v377 = vand.u32 %v376, 65535
        %v378 = vshra.s32 %v376, 16
        %v379 = vcvt.s32.f32 %v377
        %v380 = vcvt.s32.f32 %v378
        %381 = vmin.xlane.f32.xlu0 %v380
        %v382 = vpop.xlane.xlu0 %381
        %vm383 = vcmp.eq.f32.partialorder %v380, %v382
        %v384 = vsel %vm383, %v379, inf
        %385 = vmin.xlane.f32.xlu0 %v384
        %v386 = vpop.xlane.xlu0 %385
        %v387 = vcvt.f32.s32 %v386
        %v388 = vcvt.f32.s32 %v382
        %v389 = vshll.u32 %v388, 16
        %v390 = vadd.s32 %v389, %v387
        %v391 = vrot.slane %v332, 7
        %vm393 = vcmp.gt.f32.partialorder %v332, %v391
        %v394 = vsel %vm393, 1, 0
        %v395 = vcvt.s32.f32 %v394
        %396 = vst.msk [vmem:[%s235] sm:$0x1] %vm333, %v332
        %vm397 = vcmask 58369
        %398 = vst.msk [vmem:[%s241 - $0x1] sm:$0x2] %vm397, %v365
        %vm399 = vcmp.eq.s32.totalorder %v331, 0
        %v400 = vcvt.s32.f32 %v353
        %vm401 = vcmp.eq.s32.totalorder %v331, 1
        %v402 = vcvt.s32.f32 %v390
        %vm403 = vcmp.eq.s32.totalorder %v331, 2
        %vm404 = vcmp.eq.s32.totalorder %v331, 3
        %vm405 = vcmp.eq.s32.totalorder %v331, 4
        %406 = vset.pattern.permute.xlu0 0
        %407 = vperm.xlu0 %406, %v332
        %v408 = vpop.permute.xlu0 %407
        %v410 = vsel %vm405, %v408, 0.0
        %v412 = vrot.slane %v410, 1
        %v414 = vsel %vm404, %v408, %v412
        %416 = vset.pattern.permute.xlu0 0
        %417 = vperm.xlu0 %416, %v395
        %v418 = vpop.permute.xlu0 %417
        %v421 = vrot.slane %v414, 7
        %v423 = vsel %vm403, %v418, %v421
        %v425 = vrot.slane %v423, 4
        %v427 = vsel %vm401, %v402, %v425
        %v428 = vsel %vm399, %v400, %v427
        %429 = vst [vmem:[%s247] sm:$0x1] %v428
        %s430 = sand.u32 %s100, 1
        %s431 = scalar_lea.sflag [#allocation6], %s430
        %s432 = sand.u32 %s100, 1
        %s433 = scalar_lea.vmem [#allocation7], %s432
        %s434 = sand.u32 %s24, 1
        %s435 = scalar_lea.sflag [#allocation9], %s434
        %s436 = sand.u32 %s126, 1
        %s437 = scalar_lea.vmem [#allocation8], %s436
        %s438 = sand.u32 %s24, 1
        %s439 = scalar_lea.sflag [#allocation9], %s438
        %s440 = sand.u32 %s152, 1
        %s441 = scalar_lea.vmem [#allocation10], %s440
        // Predicated region
        $region37: #{tpu_custom_call.1} parent=31 // pred_check
          %p442 = pneg %p110
        $region38: #{tpu_custom_call.1} parent=31 // pred_check_branch
          %444 = sbr.rel (%p442) target = $region40
        $region39: #{tpu_custom_call.1} parent=31 // pred_region
          %446 = vsyncadd %s431, 0
          %s447 = scalar_lea.hbm %s3, %s24
          %s449 = sshll.u32 %s433, 4
          %s450 = int_to_ptr.vmem [resolvable:$true] %s449
          %s451 = sshll.u32 %s447, 4
          %s452 = int_to_ptr.hbm [resolvable:$true] %s451
          %454 = dma.vmem_to_hbm [thread:$0]  %s450, 16, %s452, %s431
        $region40: #{tpu_custom_call.1} parent=31 // pred_fallthru
          _
        // Predicated region
        $region41: #{tpu_custom_call.1} parent=31 // pred_check
          %p455 = pneg %p136
        $region42: #{tpu_custom_call.1} parent=31 // pred_check_branch
          %457 = sbr.rel (%p455) target = $region44
        $region43: #{tpu_custom_call.1} parent=31 // pred_region
          %459 = vsyncadd %s435, 0
          %s460 = scalar_lea.hbm %s4, %s24
          %s462 = sshll.u32 %s437, 4
          %s463 = int_to_ptr.vmem [resolvable:$true] %s462
          %s464 = sshll.u32 %s460, 4
          %s465 = int_to_ptr.hbm [resolvable:$true] %s464
          %467 = dma.vmem_to_hbm [thread:$0]  %s463, 16, %s465, %s435
        $region44: #{tpu_custom_call.1} parent=31 // pred_fallthru
          _
        // Predicated region
        $region45: #{tpu_custom_call.1} parent=31 // pred_check
          %p468 = pneg %p162
        $region46: #{tpu_custom_call.1} parent=31 // pred_check_branch
          %470 = sbr.rel (%p468) target = $region48
        $region47: #{tpu_custom_call.1} parent=31 // pred_region
          %472 = vsyncadd %s439, 0
          %s473 = scalar_lea.hbm %s5, %s24
          %s475 = sshll.u32 %s441, 4
          %s476 = int_to_ptr.vmem [resolvable:$true] %s475
          %s477 = sshll.u32 %s473, 4
          %s478 = int_to_ptr.hbm [resolvable:$true] %s477
          %480 = dma.vmem_to_hbm [thread:$0]  %s476, 16, %s478, %s439
        $region48: #{tpu_custom_call.1} parent=31 // pred_fallthru
          _
      $region32: #{tpu_custom_call.1} parent=5 // pred_fallthru
        _
      %p481 = scmp.le.s32.totalorder 2, %s19
      // Predicated region
      $region49: #{tpu_custom_call.1} parent=5 // pred_check
        %p482 = pneg %p481
      $region50: #{tpu_custom_call.1} parent=5 // pred_check_branch
        %484 = sbr.rel (%p482) target = $region52
      $region51: #{tpu_custom_call.1} parent=5 // pred_region
        %s485 = ssub.s32 %s19, 2
        // Predicated region
        $region53: #{tpu_custom_call.1} parent=51 // pred_check
          %p486 = pneg %p116
        $region54: #{tpu_custom_call.1} parent=51 // pred_check_branch
          %488 = sbr.rel (%p486) target = $region56
        $region55: #{tpu_custom_call.1} parent=51 // pred_region
          %s489 = sand.u32 %s101, 1
          %s490 = scalar_lea.sflag [#allocation6], %s489
          %s491 = sand.u32 %s101, 1
          %s492 = scalar_lea.vmem [#allocation7], %s491
          %494 = dma.done %s490, 16
        $region56: #{tpu_custom_call.1} parent=51 // pred_fallthru
          _
        // Predicated region
        $region57: #{tpu_custom_call.1} parent=51 // pred_check
          %p495 = pneg %p142
        $region58: #{tpu_custom_call.1} parent=51 // pred_check_branch
          %497 = sbr.rel (%p495) target = $region60
        $region59: #{tpu_custom_call.1} parent=51 // pred_region
          %s498 = sand.u32 %s25, 1
          %s499 = scalar_lea.sflag [#allocation9], %s498
          %s500 = sand.u32 %s127, 1
          %s501 = scalar_lea.vmem [#allocation8], %s500
          %503 = dma.done %s499, 16
        $region60: #{tpu_custom_call.1} parent=51 // pred_fallthru
          _
        // Predicated region
        $region61: #{tpu_custom_call.1} parent=51 // pred_check
          %p504 = pneg %p168
        $region62: #{tpu_custom_call.1} parent=51 // pred_check_branch
          %506 = sbr.rel (%p504) target = $region64
        $region63: #{tpu_custom_call.1} parent=51 // pred_region
          %s507 = sand.u32 %s25, 1
          %s508 = scalar_lea.sflag [#allocation9], %s507
          %s509 = sand.u32 %s153, 1
          %s510 = scalar_lea.vmem [#allocation10], %s509
          %512 = dma.done %s508, 16
        $region64: #{tpu_custom_call.1} parent=51 // pred_fallthru
          _
      $region52: #{tpu_custom_call.1} parent=5 // pred_fallthru
        _
    $region6: #{tpu_custom_call.1} parent=1 // loop_footer
      %s23 = sadd.s32 1, %s19
    $region7: #{tpu_custom_call.1} parent=1 // loop_footer_branch
      %18 = sbr.rel target = $region3
    $region8: #{tpu_custom_call.1} parent=1 // loop_exit
      _
    %513 = vsyncpa [#allocation5], 1
    %s514 = scalar_lea.sflag [#allocation5], 1
    %515 = vsyncpa %s514, 1
    %516 = vsyncpa [#allocation6], 1
    %s517 = scalar_lea.sflag [#allocation6], 1
    %518 = vsyncpa %s517, 1
    %519 = vsyncpa [#allocation9], 1
    %s520 = scalar_lea.sflag [#allocation9], 1
    %521 = vsyncpa %s520, 1

</llo_original>
